<compile_context>
chip_gen: v5e
topology: v5e:2x2
jax: 0.10.0
libtpu: 0.0.40
codegen_flags: <defaults>
</compile_context>

<pallas_src>
import functools

import jax
import jax.numpy as jnp
from jax.experimental import pallas as pl
from jax.experimental.pallas import tpu as pltpu


def _round_up(x, m):
    return (x + m - 1) // m * m


def ce_loss_kernel(logits_ref, target_ref, out_ref, *, n_valid, tile_n):
    """One batch tile: fused CE loss + top-1/top-5 partial counts.

    Writes a lane-dense (8, 128) partials tile:
      [0, 0] = sum of per-sample CE loss over the valid rows of this tile
      [0, 1] = count of valid rows whose target is the arg-max     (top-1)
      [0, 2] = count of valid rows whose target is within the top-5
    Everything else is zero; the wrapper sums tiles and normalizes.
    """
    x = logits_ref[...].astype(jnp.float32)          # (tile_n, C), f32 math
    tgt = target_ref[...]                            # (tile_n, 1) int32
    tn, c = x.shape

    # Row validity mask: handles the ragged last batch block (garbage rows may
    # contain anything, incl. NaN/Inf; every reduction below is masked by it).
    row = (pl.program_id(0) * tile_n
           + jax.lax.broadcasted_iota(jnp.int32, (tn, 1), 0))
    valid = row < n_valid                            # (tile_n, 1) bool

    # --- fused single pass while x is live -----------------------------------
    # Class axis is a full-dim block: Mosaic masks internal lane padding in the
    # reductions, so no explicit class-validity mask is required.
    m = jnp.max(x, axis=-1, keepdims=True)           # (tile_n, 1)
    e = jnp.exp(x - m)
    lse = m + jnp.log(jnp.sum(e, axis=-1, keepdims=True))

    # Target gather: per-lane (1, C) iota compared against broadcast targets.
    col = jax.lax.broadcasted_iota(jnp.int32, (1, c), 1)
    tgt_logit = jnp.sum(jnp.where(col == tgt, x, 0.0), axis=-1, keepdims=True)

    per_sample = lse - tgt_logit                     # -log p(target)

    # top-k via strictly-greater rank count; sum bools directly (no float cast).
    rank = jnp.sum(x > tgt_logit, axis=-1, keepdims=True)    # int32
    is_top1 = tgt_logit >= m                         # == (rank < 1), no extra reduce
    is_top5 = rank < 5

    loss_sum = jnp.sum(jnp.where(valid, per_sample, 0.0))
    top1 = jnp.sum(jnp.where(valid & is_top1, 1.0, 0.0))
    top5 = jnp.sum(jnp.where(valid & is_top5, 1.0, 0.0))

    # Lane-dense (8, 128) partials tile; one unmasked full-tile store per step.
    lane = jax.lax.broadcasted_iota(jnp.int32, (8, 128), 1)
    sub = jax.lax.broadcasted_iota(jnp.int32, (8, 128), 0)
    first = sub == 0
    out_ref[...] = jnp.where(
        first & (lane == 0), loss_sum,
        jnp.where(first & (lane == 1), top1,
                  jnp.where(first & (lane == 2), top5, 0.0))).astype(jnp.float32)


def ce_loss(logits, target, *, tile_n=None):
    """CELoss.forward equivalent. Returns (mean_ce_loss, acc1_%, acc5_%).

    Logits are consumed in their given dtype (pass bf16 from the producer for
    half the HBM traffic); all math inside the kernel is f32.
    """
    n, c = logits.shape
    itemsize = jnp.dtype(logits.dtype).itemsize

    # Generation-aware budgets: v5e/v6e have 128 MiB physical VMEM, v7x 64 MiB.
    kind = ""
    try:
        kind = jax.devices()[0].device_kind.lower()
    except Exception:  # pragma: no cover - be conservative if query fails
        pass
    big_vmem = ("v5" in kind) or ("v6" in kind)
    tile_budget_bytes = (8 if big_vmem else 4) * 1024 * 1024   # f32 footprint/tile
    vmem_limit_bytes = (96 if big_vmem else 48) * 1024 * 1024

    if tile_n is None:
        # Size the tile from the VMEM budget (no fixed row cap): 2 input
        # buffers + ~3-4 full-tile f32 temporaries stay under vmem_limit_bytes.
        elem_budget = tile_budget_bytes // 4
        tile_n = max(8, (elem_budget // max(c, 1)) // 8 * 8)
        # Keep >=2 (ideally >=4) grid steps so the "parallel" axis can shard
        # across v7x's two TensorCores and DMA/compute overlap has work.
        if n >= 64:
            tile_n = min(tile_n, max(8, _round_up(pl.cdiv(n, 4), 8)))
        elif n >= 16:
            tile_n = min(tile_n, max(8, _round_up(pl.cdiv(n, 2), 8)))
    tile_n = int(tile_n)
    if tile_n >= n:
        tile_n = n                       # single full-dim block (always legal)
    elif tile_n % 8 != 0:
        tile_n = max(8, tile_n // 8 * 8)  # interior blocks need sublane multiple
        if tile_n >= n:
            tile_n = n

    num_tiles = pl.cdiv(n, tile_n)
    tgt = target.astype(jnp.int32).reshape(n, 1)

    kernel = functools.partial(ce_loss_kernel, n_valid=n, tile_n=tile_n)

    partials = pl.pallas_call(
        kernel,
        out_shape=jax.ShapeDtypeStruct((num_tiles * 8, 128), jnp.float32),
        grid=(num_tiles,),
        in_specs=[
            # Full class dim per block (legal even when C % 128 != 0); ragged
            # last batch block is masked in-kernel -> no host-side padding.
            pl.BlockSpec((tile_n, c), lambda i: (i, 0)),
            pl.BlockSpec((tile_n, 1), lambda i: (i, 0)),
        ],
        out_specs=pl.BlockSpec((8, 128), lambda i: (i, 0)),
        compiler_params=pltpu.CompilerParams(
            dimension_semantics=("parallel",),
            vmem_limit_bytes=vmem_limit_bytes),
        cost_estimate=pl.CostEstimate(
            flops=8 * n * c,
            transcendentals=n * c,
            bytes_accessed=n * c * itemsize + n * 4 + num_tiles * 8 * 128 * 4),
    )(logits, tgt)

    sums = jnp.sum(partials, axis=0)                 # (128,) -> lanes 0..2 used
    loss = sums[0] / n
    acc1 = sums[1] * (100.0 / n)
    acc5 = sums[2] * (100.0 / n)
    return loss, acc1, acc5


if __name__ == "__main__":
    key = jax.random.PRNGKey(0)
    k_logits, k_tgt = jax.random.split(key)

    # Small shape consistent with the module: batch=8, num_classes=32 (>= 5).
    N, C = 8, 32
    logits = jax.random.normal(k_logits, (N, C), dtype=jnp.float32)
    target = jax.random.randint(k_tgt, (N,), 0, C, dtype=jnp.int32)

    loss, acc1, acc5 = ce_loss(logits, target)
    jax.block_until_ready(loss)

    # Plain-JAX reference checks.
    logp = jax.nn.log_softmax(logits, axis=-1)
    ref_loss = -jnp.mean(logp[jnp.arange(N), target])
    assert jnp.allclose(loss, ref_loss, atol=1e-5, rtol=1e-5), (loss, ref_loss)

    ref_top1 = jnp.mean(
        (jnp.argmax(logits, axis=-1) == target).astype(jnp.float32)) * 100.0
    assert jnp.allclose(acc1, ref_top1, atol=1e-4), (acc1, ref_top1)

    top5_idx = jax.lax.top_k(logits, 5)[1]
    ref_top5 = jnp.mean(
        jnp.any(top5_idx == target[:, None], axis=-1).astype(jnp.float32)) * 100.0
    assert jnp.allclose(acc5, ref_top5, atol=1e-4), (acc5, ref_top5)

    # Natively-bf16 logits path (no wrapper cast -> genuine HBM saving).
    logits_b = jax.random.normal(k_logits, (N, C), jnp.float32).astype(jnp.bfloat16)
    loss_b, _, _ = ce_loss(logits_b, target)
    jax.block_until_ready(loss_b)
    logp_b = jax.nn.log_softmax(logits_b.astype(jnp.float32), axis=-1)
    ref_loss_b = -jnp.mean(logp_b[jnp.arange(N), target])
    assert jnp.allclose(loss_b, ref_loss_b, atol=5e-3, rtol=5e-3), (loss_b, ref_loss_b)

    # Multi-tile grid with ragged last batch block and non-128-aligned C,
    # user-specified tile_n (no host-side padding anywhere).
    N2, C2 = 100, 1000
    logits2 = jax.random.normal(k_logits, (N2, C2), dtype=jnp.float32)
    target2 = jax.random.randint(k_tgt, (N2,), 0, C2, dtype=jnp.int32)
    loss2, _, _ = ce_loss(logits2, target2, tile_n=32)
    jax.block_until_ready(loss2)
    logp2 = jax.nn.log_softmax(logits2, axis=-1)
    ref_loss2 = -jnp.mean(logp2[jnp.arange(N2), target2])
    assert jnp.allclose(loss2, ref_loss2, atol=1e-4, rtol=1e-4), (loss2, ref_loss2)

    # Auto-tile path: ragged last block + C not a multiple of 128.
    N3, C3 = 300, 257
    logits3 = jax.random.normal(k_logits, (N3, C3), dtype=jnp.float32)
    target3 = jax.random.randint(k_tgt, (N3,), 0, C3, dtype=jnp.int32)
    loss3, _, _ = ce_loss(logits3, target3)
    jax.block_until_ready(loss3)
    logp3 = jax.nn.log_softmax(logits3, axis=-1)
    ref_loss3 = -jnp.mean(logp3[jnp.arange(N3), target3])
    assert jnp.allclose(loss3, ref_loss3, atol=1e-4, rtol=1e-4), (loss3, ref_loss3)

    print("KERNEL_OK")
</pallas_src>

<mosaic_0001>
module attributes {stable_mosaic.version = 11 : i64} {
  func.func @ce_loss_kernel(%arg0: i32, %arg1: memref<8x32xf32, #tpu.memory_space<vmem>>, %arg2: memref<8x1xi32, #tpu.memory_space<vmem>>, %arg3: memref<8x128xf32, #tpu.memory_space<vmem>>) attributes {dimension_semantics = [#tpu.dimension_semantics<parallel>], iteration_bounds = array<i64: 1>, scalar_prefetch = 0 : i64, scratch_operands = 0 : i64, tpu.core_type = #tpu.core_type<tc>, window_params = [{transform_indices = @transform_0, window_bounds = array<i64: 8, 32>}, {transform_indices = @transform_1, window_bounds = array<i64: 8, 1>}, {transform_indices = @transform_2, window_bounds = array<i64: 8, 128>}]} {
    %c0 = arith.constant 0 : index
    %c0_0 = arith.constant 0 : index
    %0 = vector.load %arg1[%c0, %c0_0] : memref<8x32xf32, #tpu.memory_space<vmem>>, vector<8x32xf32>
    %c0_1 = arith.constant 0 : index
    %c0_2 = arith.constant 0 : index
    %1 = vector.load %arg2[%c0_1, %c0_2] : memref<8x1xi32, #tpu.memory_space<vmem>>, vector<8x1xi32>
    %c8_i32 = arith.constant 8 : i32
    %2 = arith.muli %arg0, %c8_i32 : i32
    %3 = tpu.iota {dimensions = array<i32: 0>} : vector<8x1xi32>
    %4 = vector.broadcast %2 : i32 to vector<8x1xi32>
    %5 = arith.addi %4, %3 : vector<8x1xi32>
    %c8_i32_3 = arith.constant 8 : i32
    %6 = vector.broadcast %c8_i32_3 : i32 to vector<8x1xi32>
    %7 = arith.cmpi slt, %5, %6 : vector<8x1xi32>
    %cst = arith.constant dense<0xFF800000> : vector<8xf32>
    %8 = vector.multi_reduction <maximumf>, %0, %cst [1] : vector<8x32xf32> to vector<8xf32>
    %9 = vector.shape_cast %8 : vector<8xf32> to vector<8x1xf32>
    %10 = vector.broadcast %9 : vector<8x1xf32> to vector<8x32xf32>
    %11 = arith.subf %0, %10 : vector<8x32xf32>
    %12 = math.exp %11 : vector<8x32xf32>
    %cst_4 = arith.constant dense<0.000000e+00> : vector<8xf32>
    %13 = vector.multi_reduction <add>, %12, %cst_4 [1] : vector<8x32xf32> to vector<8xf32>
    %14 = vector.shape_cast %13 : vector<8xf32> to vector<8x1xf32>
    %15 = math.log %14 : vector<8x1xf32>
    %16 = arith.addf %9, %15 : vector<8x1xf32>
    %17 = tpu.iota {dimensions = array<i32: 1>} : vector<1x32xi32>
    %18 = vector.broadcast %17 : vector<1x32xi32> to vector<8x32xi32>
    %19 = vector.broadcast %1 : vector<8x1xi32> to vector<8x32xi32>
    %20 = arith.cmpi eq, %18, %19 : vector<8x32xi32>
    %cst_5 = arith.constant 0.000000e+00 : f32
    %21 = vector.broadcast %cst_5 : f32 to vector<8x32xf32>
    %22 = arith.select %20, %0, %21 : vector<8x32xi1>, vector<8x32xf32>
    %cst_6 = arith.constant dense<0.000000e+00> : vector<8xf32>
    %23 = vector.multi_reduction <add>, %22, %cst_6 [1] : vector<8x32xf32> to vector<8xf32>
    %24 = vector.shape_cast %23 : vector<8xf32> to vector<8x1xf32>
    %25 = arith.subf %16, %24 : vector<8x1xf32>
    %26 = vector.broadcast %24 : vector<8x1xf32> to vector<8x32xf32>
    %27 = arith.cmpf ogt, %0, %26 : vector<8x32xf32>
    %28 = arith.extui %27 : vector<8x32xi1> to vector<8x32xi32>
    %cst_7 = arith.constant dense<0> : vector<8xi32>
    %29 = vector.multi_reduction <add>, %28, %cst_7 [1] : vector<8x32xi32> to vector<8xi32>
    %30 = vector.shape_cast %29 : vector<8xi32> to vector<8x1xi32>
    %31 = arith.cmpf oge, %24, %9 : vector<8x1xf32>
    %c5_i32 = arith.constant 5 : i32
    %32 = vector.broadcast %c5_i32 : i32 to vector<8x1xi32>
    %33 = arith.cmpi slt, %30, %32 : vector<8x1xi32>
    %cst_8 = arith.constant 0.000000e+00 : f32
    %34 = vector.broadcast %cst_8 : f32 to vector<8x1xf32>
    %35 = arith.select %7, %25, %34 : vector<8x1xi1>, vector<8x1xf32>
    %36 = vector.shape_cast %35 : vector<8x1xf32> to vector<1x8x1xf32>
    %cst_9 = arith.constant dense<0.000000e+00> : vector<1xf32>
    %37 = vector.multi_reduction <add>, %36, %cst_9 [1, 2] : vector<1x8x1xf32> to vector<1xf32>
    %38 = vector.shape_cast %37 : vector<1xf32> to vector<1x1x1xf32>
    %39 = vector.extract %38[0, 0, 0] : f32 from vector<1x1x1xf32>
    %40 = arith.andi %7, %31 : vector<8x1xi1>
    %cst_10 = arith.constant 1.000000e+00 : f32
    %cst_11 = arith.constant 0.000000e+00 : f32
    %41 = vector.broadcast %cst_10 : f32 to vector<8x1xf32>
    %42 = vector.broadcast %cst_11 : f32 to vector<8x1xf32>
    %43 = arith.select %40, %41, %42 : vector<8x1xi1>, vector<8x1xf32>
    %44 = vector.shape_cast %43 : vector<8x1xf32> to vector<1x8x1xf32>
    %cst_12 = arith.constant dense<0.000000e+00> : vector<1xf32>
    %45 = vector.multi_reduction <add>, %44, %cst_12 [1, 2] : vector<1x8x1xf32> to vector<1xf32>
    %46 = vector.shape_cast %45 : vector<1xf32> to vector<1x1x1xf32>
    %47 = vector.extract %46[0, 0, 0] : f32 from vector<1x1x1xf32>
    %48 = arith.andi %7, %33 : vector<8x1xi1>
    %cst_13 = arith.constant 1.000000e+00 : f32
    %cst_14 = arith.constant 0.000000e+00 : f32
    %49 = vector.broadcast %cst_13 : f32 to vector<8x1xf32>
    %50 = vector.broadcast %cst_14 : f32 to vector<8x1xf32>
    %51 = arith.select %48, %49, %50 : vector<8x1xi1>, vector<8x1xf32>
    %52 = vector.shape_cast %51 : vector<8x1xf32> to vector<1x8x1xf32>
    %cst_15 = arith.constant dense<0.000000e+00> : vector<1xf32>
    %53 = vector.multi_reduction <add>, %52, %cst_15 [1, 2] : vector<1x8x1xf32> to vector<1xf32>
    %54 = vector.shape_cast %53 : vector<1xf32> to vector<1x1x1xf32>
    %55 = vector.extract %54[0, 0, 0] : f32 from vector<1x1x1xf32>
    %56 = tpu.iota {dimensions = array<i32: 1>} : vector<8x128xi32>
    %57 = tpu.iota {dimensions = array<i32: 0>} : vector<8x128xi32>
    %c0_i32 = arith.constant 0 : i32
    %58 = vector.broadcast %c0_i32 : i32 to vector<8x128xi32>
    %59 = arith.cmpi eq, %57, %58 : vector<8x128xi32>
    %c0_i32_16 = arith.constant 0 : i32
    %60 = vector.broadcast %c0_i32_16 : i32 to vector<8x128xi32>
    %61 = arith.cmpi eq, %56, %60 : vector<8x128xi32>
    %62 = arith.andi %59, %61 : vector<8x128xi1>
    %c1_i32 = arith.constant 1 : i32
    %63 = vector.broadcast %c1_i32 : i32 to vector<8x128xi32>
    %64 = arith.cmpi eq, %56, %63 : vector<8x128xi32>
    %65 = arith.andi %59, %64 : vector<8x128xi1>
    %c2_i32 = arith.constant 2 : i32
    %66 = vector.broadcast %c2_i32 : i32 to vector<8x128xi32>
    %67 = arith.cmpi eq, %56, %66 : vector<8x128xi32>
    %68 = arith.andi %59, %67 : vector<8x128xi1>
    %cst_17 = arith.constant 0.000000e+00 : f32
    %69 = vector.broadcast %55 : f32 to vector<8x128xf32>
    %70 = vector.broadcast %cst_17 : f32 to vector<8x128xf32>
    %71 = arith.select %68, %69, %70 : vector<8x128xi1>, vector<8x128xf32>
    %72 = vector.broadcast %47 : f32 to vector<8x128xf32>
    %73 = arith.select %65, %72, %71 : vector<8x128xi1>, vector<8x128xf32>
    %74 = vector.broadcast %39 : f32 to vector<8x128xf32>
    %75 = arith.select %62, %74, %73 : vector<8x128xi1>, vector<8x128xf32>
    %c0_18 = arith.constant 0 : index
    %c0_19 = arith.constant 0 : index
    %76 = vector.load %arg3[%c0_18, %c0_19] : memref<8x128xf32, #tpu.memory_space<vmem>>, vector<8x128xf32>
    tpu.vector_store %arg3[%c0_18, %c0_19], %75 {strides = array<i32>} : memref<8x128xf32, #tpu.memory_space<vmem>>, vector<8x128xf32>,
    return
  }
  func.func @transform_0(%arg0: i32) -> (i32, i32) {
    %c0_i32 = arith.constant 0 : i32
    %c0_i32_0 = arith.constant 0 : i32
    return %arg0, %c0_i32 : i32, i32
  }
  func.func @transform_1(%arg0: i32) -> (i32, i32) {
    %c0_i32 = arith.constant 0 : i32
    %c0_i32_0 = arith.constant 0 : i32
    return %arg0, %c0_i32 : i32, i32
  }
  func.func @transform_2(%arg0: i32) -> (i32, i32) {
    %c0_i32 = arith.constant 0 : i32
    %c0_i32_0 = arith.constant 0 : i32
    return %arg0, %c0_i32 : i32, i32
  }
}

</mosaic_0001>

<llo_original>
// kernel: tpu_custom_call.1
$region0: #{tpu_custom_call.1}
  #allocation0 [shape = 'u32[]', space=smem, size = 0x4, offset = 0x4, fixed_abs, tag = 'smem constant byte address 0x4 - core index']
  #allocation1 [shape = 'u32[72,128]{1,0:T(1,128)}', space=vmem, size = 0x9000, scoped, tag = 'internal scratch']
  %s0 = inlined_call_operand.vmem [shape: f32[8,32], index: 0, kind: input, shape index: {}]
  %s1 = inlined_call_operand.vmem [shape: s32[8,1], index: 1, kind: input, shape index: {}]
  %s2 = inlined_call_operand.hbm [shape: f32[8,128], index: 2, kind: output, shape index: {}]
  %s3 = sld [smem:[#allocation0]]
  $region18: #{tpu_custom_call.1} parent=0
    _
  %s5 = ssub.s32 1, %s3
  %s6 = scalar_select 0, %s5, %s3
  $region1: #{tpu_custom_call.1} parent=0
    #allocation2 [shape = 'u8[4096]{0}', space=vmem, size = 0x1000, scoped, tag = 'output window, operand 0, single buffered']
    #allocation3 [shape = 's32[1]{0}', space=sflag, size = 0x4, scoped, tag = 'scoped memory for tpu_custom_call.1']
    %7 = vsyncpa [#allocation3], 0
    // Predicated region
    $region2: #{tpu_custom_call.1} parent=1 // pred_check
      _
    $region3: #{tpu_custom_call.1} parent=1 // pred_check_branch
      %9 = sbr.rel (0) target = $region5
    $region4: #{tpu_custom_call.1} parent=1 // pred_region
      _
    $region5: #{tpu_custom_call.1} parent=1 // pred_fallthru
      _
    // Predicated region
    $region6: #{tpu_custom_call.1} parent=1 // pred_check
      _
    $region7: #{tpu_custom_call.1} parent=1 // pred_check_branch
      %11 = sbr.rel (0) target = $region9
    $region8: #{tpu_custom_call.1} parent=1 // pred_region
      _
    $region9: #{tpu_custom_call.1} parent=1 // pred_fallthru
      _
    %v12 = vld [vmem:[%s0] sm:$0xff]
    %v13 = vld [vmem:[%s1] sm:$0xff]
    %s14 = smul.u32 0, 8
    %v15 = vlaneseq
    %v16 = vshrl.u32 %v15, 7
    %v17 = vstv %s14
    %v18 = vadd.s32 %v17, %v16
    %vm19 = vcmp.lt.s32.totalorder %v18, 8
    %vm20 = vcmask 261120
    %v21 = vsel %vm20, %v12, -inf
    %22 = vmax.xlane.f32.xlu0 %v21
    %v23 = vpop.xlane.xlu0 %22
    %v24 = vsub.f32 %v12, %v23
    %v25 = vmul.f32 %v24, 1.442695
    %v26 = vpow.pop %v25
    %v27 = vsel %vm20, %v26, 0.0
    %28 = vadd.xlane.f32.xlu0 %v27
    %v29 = vpop.xlane.xlu0 %28
    %v30 = vlog2.pop %v29
    %v31 = vmul.f32 %v30, 0.6931472
    %v32 = vadd.f32 %v23, %v31
    %v33 = vlaneseq
    %v34 = vand.u32 %v33, 127
    %35 = vset.pattern.permute.xlu0 0
    %36 = vperm.xlu0 %35, %v13
    %v37 = vpop.permute.xlu0 %36
    %vm38 = vcmp.eq.s32.totalorder %v34, %v37
    %v39 = vsel %vm38, %v12, 0.0
    %v40 = vsel %vm20, %v39, 0.0
    %41 = vadd.xlane.f32.xlu0 %v40
    %v42 = vpop.xlane.xlu0 %41
    %v43 = vsub.f32 %v32, %v42
    %vm44 = vcmp.gt.f32.partialorder %v12, %v42
    %v45 = vsel %vm44, 1, 0
    %v46 = vsel %vm20, %v45, 0
    %v47 = vand.u32 %v46, 65535
    %v48 = vshrl.u32 %v46, 16
    %v49 = vcvt.s32.f32 %v47
    %v50 = vcvt.s32.f32 %v48
    %51 = vadd.xlane.f32.xlu0 %v49
    %v52 = vpop.xlane.xlu0 %51
    %53 = vadd.xlane.f32.xlu0 %v50
    %v54 = vpop.xlane.xlu0 %53
    %v55 = vcvt.f32.s32 %v52
    %v56 = vcvt.f32.s32 %v54
    %v57 = vshll.u32 %v56, 16
    %v58 = vadd.s32 %v57, %v55
    %vm59 = vcmp.ge.f32.partialorder %v42, %v23
    %vm60 = vcmp.lt.s32.totalorder %v58, 5
    %v61 = vsel %vm19, %v43, 0.0
    %vm62 = vcmask 7168
    %v63 = vsel %vm62, %v61, 0.0
    %64 = vadd.xlane.f32.xlu0 %v63
    %v65 = vpop.xlane.xlu0 %64
    %v66 = vrot.slane %v65, 4
    %v67 = vadd.f32 %v65, %v66
    %v68 = vrot.slane %v67, 2
    %v69 = vadd.f32 %v67, %v68
    %v70 = vrot.slane %v69, 1
    %v71 = vadd.f32 %v69, %v70
    %s72 = vtos %v71
    %vm73 = vmand %vm19, %vm59
    %v74 = vsel %vm73, 1.0, 0.0
    %v75 = vsel %vm62, %v74, 0.0
    %76 = vadd.xlane.f32.xlu0 %v75
    %v77 = vpop.xlane.xlu0 %76
    %v78 = vrot.slane %v77, 4
    %v79 = vadd.f32 %v77, %v78
    %v80 = vrot.slane %v79, 2
    %v81 = vadd.f32 %v79, %v80
    %v82 = vrot.slane %v81, 1
    %v83 = vadd.f32 %v81, %v82
    %s84 = vtos %v83
    %vm85 = vmand %vm19, %vm60
    %v86 = vsel %vm85, 1.0, 0.0
    %v87 = vsel %vm62, %v86, 0.0
    %88 = vadd.xlane.f32.xlu0 %v87
    %v89 = vpop.xlane.xlu0 %88
    %v90 = vrot.slane %v89, 4
    %v91 = vadd.f32 %v89, %v90
    %v92 = vrot.slane %v91, 2
    %v93 = vadd.f32 %v91, %v92
    %v94 = vrot.slane %v93, 1
    %v95 = vadd.f32 %v93, %v94
    %s96 = vtos %v95
    %vm97 = vcmp.eq.s32.totalorder %v16, 0
    %vm98 = vcmp.eq.s32.totalorder %v34, 0
    %vm99 = vmand %vm97, %vm98
    %vm100 = vcmp.eq.s32.totalorder %v34, 1
    %vm101 = vmand %vm97, %vm100
    %vm102 = vcmp.eq.s32.totalorder %v34, 2
    %vm103 = vmand %vm97, %vm102
    %v104 = vstv %s96
    %v105 = vsel %vm103, %v104, 0.0
    %v106 = vstv %s84
    %v107 = vsel %vm101, %v106, %v105
    %v108 = vstv %s72
    %v109 = vsel %vm99, %v108, %v107
    %110 = vst [vmem:[#allocation2] sm:$0xff] %v109
    // Predicated region
    $region10: #{tpu_custom_call.1} parent=1 // pred_check
      _
    $region11: #{tpu_custom_call.1} parent=1 // pred_check_branch
      %112 = sbr.rel (0) target = $region13
    $region12: #{tpu_custom_call.1} parent=1 // pred_region
      %114 = vsyncadd [#allocation3], 0
      %s116 = sshll.u32 [#allocation2], 4
      %s117 = int_to_ptr.vmem [resolvable:$true] %s116
      %s118 = sshll.u32 %s2, 4
      %s119 = int_to_ptr.hbm [resolvable:$true] %s118
      %121 = dma.vmem_to_hbm [thread:$0]  %s117, 128, %s119, [#allocation3]
    $region13: #{tpu_custom_call.1} parent=1 // pred_fallthru
      _
    // Predicated region
    $region14: #{tpu_custom_call.1} parent=1 // pred_check
      _
    $region15: #{tpu_custom_call.1} parent=1 // pred_check_branch
      %123 = sbr.rel (0) target = $region17
    $region16: #{tpu_custom_call.1} parent=1 // pred_region
      %125 = dma.done [#allocation3], 128
    $region17: #{tpu_custom_call.1} parent=1 // pred_fallthru
      _
    %126 = vsyncpa [#allocation3], 1

</llo_original>
